<compile_context>
chip_gen: v7x
topology: tpu7x:2x2x1
jax: 0.10.0
libtpu: 0.0.40
codegen_flags: <defaults>
</compile_context>

<pallas_src>
import jax
import jax.numpy as jnp
from jax.experimental import pallas as pl
from jax.experimental.pallas import tpu as pltpu

_LANE = 128
_SUBLANE = 8
_GRAN = _LANE * _SUBLANE  # 1024: tile granularity for full (8,128) vregs


def _round_up(n, m):
    return ((n + m - 1) // m) * m


def _mlp_kernel(x_ref, w1_ref, b1_ref, w2_ref, b2_ref, out_ref):
    """One batch tile of the 2-layer MLP, batch packed on (sublane, lane).

    x_ref:   (input_dim,  R, 128)  VMEM   (R = tb // 128, multiple of 8)
    w1_ref:  (input_dim, hidden)   SMEM   (scalar reads)
    b1_ref:  (hidden,)             SMEM
    w2_ref:  (hidden, output_dim)  SMEM
    b2_ref:  (output_dim,)         SMEM
    out_ref: (output_dim, R, 128)  VMEM
    """
    input_dim = x_ref.shape[0]
    hidden = b1_ref.shape[0]
    output_dim = b2_ref.shape[0]

    # Per-feature dense slabs: (R, 128) each -> full (8,128) vreg occupancy.
    x_rows = [x_ref[k] for k in range(input_dim)]

    # Layer 1: h_j = tanh(sum_k w1[k, j] * x_k + b1[j])   -- VPU FMAs + EUP tanh
    h_rows = []
    for j in range(hidden):
        acc = w1_ref[0, j] * x_rows[0]
        for k in range(1, input_dim):
            acc = acc + w1_ref[k, j] * x_rows[k]
        h_rows.append(jnp.tanh(acc + b1_ref[j]))

    # Layer 2: o_i = sigmoid(sum_j w2[j, i] * h_j + b2[i]) -- VPU FMAs + EUP
    # Store each output row directly (no concatenate temporary).
    for i in range(output_dim):
        acc = w2_ref[0, i] * h_rows[0]
        for j in range(1, hidden):
            acc = acc + w2_ref[j, i] * h_rows[j]
        out_ref[i] = jax.nn.sigmoid(acc + b2_ref[i]).astype(out_ref.dtype)


def nn_classifier_forward(x, w1, b1, w2, b2, *, batch_tile=65536,
                          feature_major=False):
    """Forward pass of NN_Classifier.

    x:  (B, input_dim), or (input_dim, B) if feature_major=True.
    w1: (input_dim, hidden);  b1: (1, hidden) or (hidden,)
    w2: (hidden, output_dim); b2: (1, output_dim) or (output_dim,)
    Returns (B, output_dim) float32.
    """
    if feature_major:
        input_dim, B = x.shape
    else:
        B, input_dim = x.shape
    hidden = w1.shape[1]
    output_dim = w2.shape[1]

    # Batch tile: multiple of 1024 (full (8,128) vregs), capped by batch_tile.
    tb = _round_up(min(max(batch_tile, _GRAN), _round_up(B, _GRAN)), _GRAN)
    b_pad = _round_up(B, tb)
    rows = b_pad // _LANE          # total sublane-rows of the packed batch
    r = tb // _LANE                # sublane-rows per grid step (multiple of 8)
    grid = (b_pad // tb,)

    # Feature-major, batch zero-padded, packed to (input_dim, rows, 128).
    xt = (x if feature_major else x.T).astype(jnp.float32)
    if b_pad != B:
        xt = jnp.pad(xt, ((0, 0), (0, b_pad - B)))
    x3 = xt.reshape(input_dim, rows, _LANE)

    w1_f = w1.astype(jnp.float32)
    w2_f = w2.astype(jnp.float32)
    b1_f = b1.reshape(-1).astype(jnp.float32)
    b2_f = b2.reshape(-1).astype(jnp.float32)

    cost = pl.CostEstimate(
        flops=2 * b_pad * (input_dim * hidden + hidden * output_dim),
        transcendentals=b_pad * (hidden + output_dim),
        bytes_accessed=4 * (input_dim * b_pad + output_dim * b_pad
                            + w1_f.size + b1_f.size + w2_f.size + b2_f.size),
    )

    out3 = pl.pallas_call(
        _mlp_kernel,
        out_shape=jax.ShapeDtypeStruct((output_dim, rows, _LANE), jnp.float32),
        grid_spec=pl.GridSpec(
            grid=grid,
            in_specs=[
                # x tile marches along the packed batch (sublane-row) axis.
                pl.BlockSpec((input_dim, r, _LANE), lambda i: (0, i, 0)),
                # Tiny weights/biases live whole in SMEM (resident, scalar reads).
                pl.BlockSpec(memory_space=pltpu.MemorySpace.SMEM),
                pl.BlockSpec(memory_space=pltpu.MemorySpace.SMEM),
                pl.BlockSpec(memory_space=pltpu.MemorySpace.SMEM),
                pl.BlockSpec(memory_space=pltpu.MemorySpace.SMEM),
            ],
            out_specs=pl.BlockSpec((output_dim, r, _LANE), lambda i: (0, i, 0)),
        ),
        compiler_params=pltpu.CompilerParams(
            dimension_semantics=("parallel",),   # shards batch across TCs on v7x
            vmem_limit_bytes=32 * 1024 * 1024,   # explicit; safe on v5e/v6e/v7x
        ),
        cost_estimate=cost,
    )(x3, w1_f, b1_f, w2_f, b2_f)

    # (output_dim, rows, 128) -> (output_dim, b_pad) -> strip pad -> (B, out)
    return out3.reshape(output_dim, b_pad)[:, :B].T


def xavier_uniform(key, fan_in, fan_out, dtype=jnp.float32):
    bound = (6.0 / (fan_in + fan_out)) ** 0.5
    return jax.random.uniform(key, (fan_in, fan_out), dtype=dtype,
                              minval=-bound, maxval=bound)


def reference_forward(x, w1, b1, w2, b2):
    h = jnp.tanh(x.astype(jnp.float32) @ w1 + b1)
    return jax.nn.sigmoid(h @ w2 + b2)


if __name__ == "__main__":
    # Module default config: input_dim=2, hidden_dim=3, output_dim=1, dropout=None.
    input_dim, hidden_dim, output_dim = 2, 3, 1

    key = jax.random.PRNGKey(0)
    k_x, k_w1, k_b1, k_w2, k_b2, k_x2 = jax.random.split(key, 6)

    # Xavier-uniform weights (as in initialize_weights); PyTorch-default uniform biases.
    w1 = xavier_uniform(k_w1, input_dim, hidden_dim)
    b1 = jax.random.uniform(k_b1, (1, hidden_dim), dtype=jnp.float32,
                            minval=-1.0 / input_dim ** 0.5, maxval=1.0 / input_dim ** 0.5)
    w2 = xavier_uniform(k_w2, hidden_dim, output_dim)
    b2 = jax.random.uniform(k_b2, (1, output_dim), dtype=jnp.float32,
                            minval=-1.0 / hidden_dim ** 0.5, maxval=1.0 / hidden_dim ** 0.5)

    # Test 1: tiny batch (single tile, grid=(1,)).
    batch = 8
    x = jax.random.normal(k_x, (batch, input_dim), dtype=jnp.float32)
    out = jax.block_until_ready(nn_classifier_forward(x, w1, b1, w2, b2))
    ref = reference_forward(x, w1, b1, w2, b2)
    assert out.shape == (batch, output_dim)
    assert jnp.allclose(out, ref, atol=1e-5, rtol=1e-5), "mismatch vs JAX reference (B=8)"

    # Test 2: non-multiple-of-tile batch exercising padding + multi-step grid.
    batch2 = 2050
    x2 = jax.random.normal(k_x2, (batch2, input_dim), dtype=jnp.float32)
    out2 = jax.block_until_ready(
        nn_classifier_forward(x2, w1, b1, w2, b2, batch_tile=1024))
    ref2 = reference_forward(x2, w1, b1, w2, b2)
    assert out2.shape == (batch2, output_dim)
    assert jnp.allclose(out2, ref2, atol=1e-5, rtol=1e-5), "mismatch vs JAX reference (B=2050)"

    # Test 3: feature-major input path (skips the wrapper transpose HBM pass).
    out3 = jax.block_until_ready(
        nn_classifier_forward(x2.T, w1, b1, w2, b2, batch_tile=1024,
                              feature_major=True))
    assert jnp.allclose(out3, ref2, atol=1e-5, rtol=1e-5), "mismatch (feature_major)"

    print("KERNEL_OK")
</pallas_src>

<mosaic_0001>
module attributes {stable_mosaic.version = 11 : i64} {
  func.func @_mlp_kernel(%arg0: i32, %arg1: memref<2x8x128xf32, #tpu.memory_space<vmem>>, %arg2: memref<2x3xf32, #tpu.memory_space<smem>>, %arg3: memref<3xf32, #tpu.memory_space<smem>>, %arg4: memref<3x1xf32, #tpu.memory_space<smem>>, %arg5: memref<1xf32, #tpu.memory_space<smem>>, %arg6: memref<1x8x128xf32, #tpu.memory_space<vmem>>) attributes {dimension_semantics = [#tpu.dimension_semantics<parallel>], iteration_bounds = array<i64: 1>, scalar_prefetch = 0 : i64, scratch_operands = 0 : i64, tpu.core_type = #tpu.core_type<tc>, window_params = [{transform_indices = @transform_0, window_bounds = array<i64: 2, 8, 128>}, {transform_indices = @transform_1, window_bounds = array<i64: 2, 3>}, {transform_indices = @transform_2, window_bounds = array<i64: 3>}, {transform_indices = @transform_3, window_bounds = array<i64: 3, 1>}, {transform_indices = @transform_4, window_bounds = array<i64: 1>}, {transform_indices = @transform_5, window_bounds = array<i64: 1, 8, 128>}]} {
    %c0 = arith.constant 0 : index
    %c0_0 = arith.constant 0 : index
    %c0_1 = arith.constant 0 : index
    %0 = vector.load %arg1[%c0, %c0_0, %c0_1] : memref<2x8x128xf32, #tpu.memory_space<vmem>>, vector<1x8x128xf32>
    %1 = vector.shape_cast %0 : vector<1x8x128xf32> to vector<8x128xf32>
    %c1 = arith.constant 1 : index
    %c0_2 = arith.constant 0 : index
    %c0_3 = arith.constant 0 : index
    %2 = vector.load %arg1[%c1, %c0_2, %c0_3] : memref<2x8x128xf32, #tpu.memory_space<vmem>>, vector<1x8x128xf32>
    %3 = vector.shape_cast %2 : vector<1x8x128xf32> to vector<8x128xf32>
    %c0_4 = arith.constant 0 : index
    %c0_5 = arith.constant 0 : index
    %4 = memref.load %arg2[%c0_4, %c0_5] : memref<2x3xf32, #tpu.memory_space<smem>>
    %5 = vector.broadcast %4 : f32 to vector<8x128xf32>
    %6 = arith.mulf %5, %1 : vector<8x128xf32>
    %c1_6 = arith.constant 1 : index
    %c0_7 = arith.constant 0 : index
    %7 = memref.load %arg2[%c1_6, %c0_7] : memref<2x3xf32, #tpu.memory_space<smem>>
    %8 = vector.broadcast %7 : f32 to vector<8x128xf32>
    %9 = arith.mulf %8, %3 : vector<8x128xf32>
    %10 = arith.addf %6, %9 : vector<8x128xf32>
    %c0_8 = arith.constant 0 : index
    %11 = memref.load %arg3[%c0_8] : memref<3xf32, #tpu.memory_space<smem>>
    %12 = vector.broadcast %11 : f32 to vector<8x128xf32>
    %13 = arith.addf %10, %12 : vector<8x128xf32>
    %14 = math.tanh %13 : vector<8x128xf32>
    %c0_9 = arith.constant 0 : index
    %c1_10 = arith.constant 1 : index
    %15 = memref.load %arg2[%c0_9, %c1_10] : memref<2x3xf32, #tpu.memory_space<smem>>
    %16 = vector.broadcast %15 : f32 to vector<8x128xf32>
    %17 = arith.mulf %16, %1 : vector<8x128xf32>
    %c1_11 = arith.constant 1 : index
    %c1_12 = arith.constant 1 : index
    %18 = memref.load %arg2[%c1_11, %c1_12] : memref<2x3xf32, #tpu.memory_space<smem>>
    %19 = vector.broadcast %18 : f32 to vector<8x128xf32>
    %20 = arith.mulf %19, %3 : vector<8x128xf32>
    %21 = arith.addf %17, %20 : vector<8x128xf32>
    %c1_13 = arith.constant 1 : index
    %22 = memref.load %arg3[%c1_13] : memref<3xf32, #tpu.memory_space<smem>>
    %23 = vector.broadcast %22 : f32 to vector<8x128xf32>
    %24 = arith.addf %21, %23 : vector<8x128xf32>
    %25 = math.tanh %24 : vector<8x128xf32>
    %c0_14 = arith.constant 0 : index
    %c2 = arith.constant 2 : index
    %26 = memref.load %arg2[%c0_14, %c2] : memref<2x3xf32, #tpu.memory_space<smem>>
    %27 = vector.broadcast %26 : f32 to vector<8x128xf32>
    %28 = arith.mulf %27, %1 : vector<8x128xf32>
    %c1_15 = arith.constant 1 : index
    %c2_16 = arith.constant 2 : index
    %29 = memref.load %arg2[%c1_15, %c2_16] : memref<2x3xf32, #tpu.memory_space<smem>>
    %30 = vector.broadcast %29 : f32 to vector<8x128xf32>
    %31 = arith.mulf %30, %3 : vector<8x128xf32>
    %32 = arith.addf %28, %31 : vector<8x128xf32>
    %c2_17 = arith.constant 2 : index
    %33 = memref.load %arg3[%c2_17] : memref<3xf32, #tpu.memory_space<smem>>
    %34 = vector.broadcast %33 : f32 to vector<8x128xf32>
    %35 = arith.addf %32, %34 : vector<8x128xf32>
    %36 = math.tanh %35 : vector<8x128xf32>
    %c0_18 = arith.constant 0 : index
    %c0_19 = arith.constant 0 : index
    %37 = memref.load %arg4[%c0_18, %c0_19] : memref<3x1xf32, #tpu.memory_space<smem>>
    %38 = vector.broadcast %37 : f32 to vector<8x128xf32>
    %39 = arith.mulf %38, %14 : vector<8x128xf32>
    %c1_20 = arith.constant 1 : index
    %c0_21 = arith.constant 0 : index
    %40 = memref.load %arg4[%c1_20, %c0_21] : memref<3x1xf32, #tpu.memory_space<smem>>
    %41 = vector.broadcast %40 : f32 to vector<8x128xf32>
    %42 = arith.mulf %41, %25 : vector<8x128xf32>
    %43 = arith.addf %39, %42 : vector<8x128xf32>
    %c2_22 = arith.constant 2 : index
    %c0_23 = arith.constant 0 : index
    %44 = memref.load %arg4[%c2_22, %c0_23] : memref<3x1xf32, #tpu.memory_space<smem>>
    %45 = vector.broadcast %44 : f32 to vector<8x128xf32>
    %46 = arith.mulf %45, %36 : vector<8x128xf32>
    %47 = arith.addf %43, %46 : vector<8x128xf32>
    %c0_24 = arith.constant 0 : index
    %48 = memref.load %arg5[%c0_24] : memref<1xf32, #tpu.memory_space<smem>>
    %49 = vector.broadcast %48 : f32 to vector<8x128xf32>
    %50 = arith.addf %47, %49 : vector<8x128xf32>
    %51 = arith.negf %50 : vector<8x128xf32>
    %52 = math.exp %51 : vector<8x128xf32>
    %cst = arith.constant 1.000000e+00 : f32
    %53 = vector.broadcast %cst : f32 to vector<8x128xf32>
    %54 = arith.addf %53, %52 : vector<8x128xf32>
    %55 = arith.divf %53, %54 : vector<8x128xf32>
    %c0_25 = arith.constant 0 : index
    %c0_26 = arith.constant 0 : index
    %c0_27 = arith.constant 0 : index
    %56 = vector.load %arg6[%c0_25, %c0_26, %c0_27] : memref<1x8x128xf32, #tpu.memory_space<vmem>>, vector<1x8x128xf32>
    %57 = vector.shape_cast %56 : vector<1x8x128xf32> to vector<8x128xf32>
    %58 = vector.shape_cast %55 : vector<8x128xf32> to vector<1x8x128xf32>
    tpu.vector_store %arg6[%c0_25, %c0_26, %c0_27], %58 {strides = array<i32>} : memref<1x8x128xf32, #tpu.memory_space<vmem>>, vector<1x8x128xf32>,
    return
  }
  func.func @transform_0(%arg0: i32) -> (i32, i32, i32) {
    %c0_i32 = arith.constant 0 : i32
    %c0_i32_0 = arith.constant 0 : i32
    %c0_i32_1 = arith.constant 0 : i32
    return %c0_i32, %arg0, %c0_i32_0 : i32, i32, i32
  }
  func.func @transform_1(%arg0: i32) -> (i32, i32) {
    %c0_i32 = arith.constant 0 : i32
    %c0_i32_0 = arith.constant 0 : i32
    %c0_i32_1 = arith.constant 0 : i32
    return %c0_i32, %c0_i32_0 : i32, i32
  }
  func.func @transform_2(%arg0: i32) -> i32 {
    %c0_i32 = arith.constant 0 : i32
    %c0_i32_0 = arith.constant 0 : i32
    return %c0_i32 : i32
  }
  func.func @transform_3(%arg0: i32) -> (i32, i32) {
    %c0_i32 = arith.constant 0 : i32
    %c0_i32_0 = arith.constant 0 : i32
    %c0_i32_1 = arith.constant 0 : i32
    return %c0_i32, %c0_i32_0 : i32, i32
  }
  func.func @transform_4(%arg0: i32) -> i32 {
    %c0_i32 = arith.constant 0 : i32
    %c0_i32_0 = arith.constant 0 : i32
    return %c0_i32 : i32
  }
  func.func @transform_5(%arg0: i32) -> (i32, i32, i32) {
    %c0_i32 = arith.constant 0 : i32
    %c0_i32_0 = arith.constant 0 : i32
    %c0_i32_1 = arith.constant 0 : i32
    return %c0_i32, %arg0, %c0_i32_0 : i32, i32, i32
  }
}

</mosaic_0001>

<llo_original>
// kernel: tpu_custom_call.1
$region0: #{tpu_custom_call.1}
  #allocation0 [shape = 'u32[]', space=smem, size = 0x4, offset = 0x4, fixed_abs, tag = 'smem constant byte address 0x4 - core index']
  #allocation1 [shape = 'u32[144,128]{1,0:T(1,128)}', space=vmem, size = 0x12000, scoped, tag = 'internal scratch']
  #allocation2 [shape = 'f32[1]{0:T(128)S(6)}', space=smem, size = 0x200, scoped, tag = 'scoped memory for tpu_custom_call.1']
  %s0 = inlined_call_operand.hbm [shape: f32[2,8,128], index: 0, kind: input, shape index: {}]
  %s1 = inlined_call_operand.vmem [shape: f32[2,3], index: 1, kind: input, shape index: {}]
  %s2 = inlined_call_operand.vmem [shape: f32[3], index: 2, kind: input, shape index: {}]
  %s3 = inlined_call_operand.vmem [shape: f32[3,1], index: 3, kind: input, shape index: {}]
  %s4 = inlined_call_operand.<no memory space> [shape: f32[1], index: 4, kind: input, shape index: {}]
  %s5 = inlined_call_operand.hbm [shape: f32[1,8,128], index: 5, kind: output, shape index: {}]
  %s6 = sld [smem:[#allocation0]]
  $region46: #{tpu_custom_call.1} parent=0
    _
  %s8 = ssub.s32 1, %s6
  %s9 = scalar_select 0, %s8, %s6
  %10 = sst [smem:[#allocation2]] %s4
  $region1: #{tpu_custom_call.1} parent=0
    #allocation3 [shape = 'u8[8192]{0}', space=vmem, size = 0x2000, scoped, tag = 'input window, operand 0, single buffered']
    #allocation4 [shape = 's32[1]{0}', space=sflag, size = 0x4, scoped, tag = 'scoped memory for tpu_custom_call.1']
    #allocation5 [shape = 's32[1]{0}', space=sflag, size = 0x4, scoped, tag = 'scoped memory for tpu_custom_call.1']
    #allocation6 [shape = 's32[1]{0}', space=sflag, size = 0x4, scoped, tag = 'scoped memory for tpu_custom_call.1']
    #allocation7 [shape = 'u8[1024]{0}', space=smem, size = 0x400, scoped, tag = 'input window, operand 1, single buffered']
    #allocation8 [shape = 'u8[512]{0}', space=smem, size = 0x200, scoped, tag = 'input window, operand 2, single buffered']
    #allocation9 [shape = 's32[1]{0}', space=sflag, size = 0x4, scoped, tag = 'scoped memory for tpu_custom_call.1']
    #allocation10 [shape = 'u8[2048]{0}', space=smem, size = 0x800, scoped, tag = 'input window, operand 3, single buffered']
    #allocation11 [shape = 'u8[4096]{0}', space=vmem, size = 0x1000, scoped, tag = 'output window, operand 0, single buffered']
    %11 = vsyncpa [#allocation4], 0
    %12 = vsyncpa [#allocation6], 0
    %13 = vsyncpa [#allocation9], 0
    %14 = vsyncpa [#allocation5], 0
    // Predicated region
    $region2: #{tpu_custom_call.1} parent=1 // pred_check
      _
    $region3: #{tpu_custom_call.1} parent=1 // pred_check_branch
      %16 = sbr.rel (0) target = $region5
    $region4: #{tpu_custom_call.1} parent=1 // pred_region
      %s18 = ssub.s32 256, 256
      %19 = vsyncadd [#allocation4], %s18
      %s20 = sshll.u32 [#allocation3], 4
      %s21 = int_to_ptr.vmem [resolvable:$true] %s20
      %26 = dma.hbm_to_vmem [thread:$0]  %s0, 256, %s21, [#allocation4], 128, 128, 8
    $region5: #{tpu_custom_call.1} parent=1 // pred_fallthru
      _
    // Predicated region
    $region6: #{tpu_custom_call.1} parent=1 // pred_check
      _
    $region7: #{tpu_custom_call.1} parent=1 // pred_check_branch
      %28 = sbr.rel (0) target = $region9
    $region8: #{tpu_custom_call.1} parent=1 // pred_region
      %s30 = ssub.s32 32, 32
      %31 = vsyncadd [#allocation6], %s30
      %s33 = sshll.u32 %s1, 4
      %s34 = int_to_ptr.vmem [resolvable:$true] %s33
      %36 = dma.vmem_to_smem %s34, 32, [#allocation7], [#allocation6]
    $region9: #{tpu_custom_call.1} parent=1 // pred_fallthru
      _
    // Predicated region
    $region10: #{tpu_custom_call.1} parent=1 // pred_check
      _
    $region11: #{tpu_custom_call.1} parent=1 // pred_check_branch
      %38 = sbr.rel (0) target = $region13
    $region12: #{tpu_custom_call.1} parent=1 // pred_region
      %s40 = ssub.s32 16, 16
      %41 = vsyncadd [#allocation9], %s40
      %s43 = sshll.u32 %s2, 4
      %s44 = int_to_ptr.vmem [resolvable:$true] %s43
      %46 = dma.vmem_to_smem %s44, 16, [#allocation8], [#allocation9]
    $region13: #{tpu_custom_call.1} parent=1 // pred_fallthru
      _
    // Predicated region
    $region14: #{tpu_custom_call.1} parent=1 // pred_check
      _
    $region15: #{tpu_custom_call.1} parent=1 // pred_check_branch
      %48 = sbr.rel (0) target = $region17
    $region16: #{tpu_custom_call.1} parent=1 // pred_region
      %s50 = ssub.s32 64, 64
      %51 = vsyncadd [#allocation9], %s50
      %s53 = sshll.u32 %s3, 4
      %s54 = int_to_ptr.vmem [resolvable:$true] %s53
      %56 = dma.vmem_to_smem %s54, 64, [#allocation10], [#allocation9]
    $region17: #{tpu_custom_call.1} parent=1 // pred_fallthru
      _
    // Predicated region
    $region18: #{tpu_custom_call.1} parent=1 // pred_check
      _
    $region19: #{tpu_custom_call.1} parent=1 // pred_check_branch
      %58 = sbr.rel (0) target = $region21
    $region20: #{tpu_custom_call.1} parent=1 // pred_region
      _
    $region21: #{tpu_custom_call.1} parent=1 // pred_fallthru
      _
    // Predicated region
    $region22: #{tpu_custom_call.1} parent=1 // pred_check
      _
    $region23: #{tpu_custom_call.1} parent=1 // pred_check_branch
      %60 = sbr.rel (0) target = $region25
    $region24: #{tpu_custom_call.1} parent=1 // pred_region
      %61 = dma.done [#allocation4], 256
    $region25: #{tpu_custom_call.1} parent=1 // pred_fallthru
      _
    // Predicated region
    $region26: #{tpu_custom_call.1} parent=1 // pred_check
      _
    $region27: #{tpu_custom_call.1} parent=1 // pred_check_branch
      %63 = sbr.rel (0) target = $region29
    $region28: #{tpu_custom_call.1} parent=1 // pred_region
      %64 = dma.done [#allocation6], 32
    $region29: #{tpu_custom_call.1} parent=1 // pred_fallthru
      _
    // Predicated region
    $region30: #{tpu_custom_call.1} parent=1 // pred_check
      _
    $region31: #{tpu_custom_call.1} parent=1 // pred_check_branch
      %66 = sbr.rel (0) target = $region33
    $region32: #{tpu_custom_call.1} parent=1 // pred_region
      %67 = dma.done [#allocation9], 16
    $region33: #{tpu_custom_call.1} parent=1 // pred_fallthru
      _
    // Predicated region
    $region34: #{tpu_custom_call.1} parent=1 // pred_check
      _
    $region35: #{tpu_custom_call.1} parent=1 // pred_check_branch
      %69 = sbr.rel (0) target = $region37
    $region36: #{tpu_custom_call.1} parent=1 // pred_region
      %70 = dma.done [#allocation9], 64
    $region37: #{tpu_custom_call.1} parent=1 // pred_fallthru
      _
    %71 = sfence
    %v72 = vld [vmem:[#allocation3] sm:$0xff]
    %s73 = scalar_lea.vmem [#allocation3], 8
    %v74 = vld [vmem:[%s73] sm:$0xff]
    %s75 = sld [smem:[#allocation7]]
    %v76 = vstv %s75
    %v77 = vmul.f32 %v76, %v72
    %s78 = sld [smem:[#allocation7 + $0x80]]
    %v79 = vstv %s78
    %v80 = vmul.f32 %v79, %v74
    %v81 = vadd.f32 %v77, %v80
    %s82 = sld [smem:[#allocation8]]
    %v83 = vstv %s82
    %v84 = vadd.f32 %v81, %v83
    %v85 = vtanh.pop %v84
    %s86 = sld [smem:[#allocation7 + $0x1]]
    %v87 = vstv %s86
    %v88 = vmul.f32 %v87, %v72
    %s89 = sld [smem:[#allocation7 + $0x81]]
    %v90 = vstv %s89
    %v91 = vmul.f32 %v90, %v74
    %v92 = vadd.f32 %v88, %v91
    %s93 = sld [smem:[#allocation8 + $0x1]]
    %v94 = vstv %s93
    %v95 = vadd.f32 %v92, %v94
    %v96 = vtanh.pop %v95
    %s97 = sld [smem:[#allocation7 + $0x2]]
    %v98 = vstv %s97
    %v99 = vmul.f32 %v98, %v72
    %s100 = sld [smem:[#allocation7 + $0x82]]
    %v101 = vstv %s100
    %v102 = vmul.f32 %v101, %v74
    %v103 = vadd.f32 %v99, %v102
    %s104 = sld [smem:[#allocation8 + $0x2]]
    %v105 = vstv %s104
    %v106 = vadd.f32 %v103, %v105
    %v107 = vtanh.pop %v106
    %s108 = sld [smem:[#allocation10]]
    %v109 = vstv %s108
    %v110 = vmul.f32 %v109, %v85
    %s111 = sld [smem:[#allocation10 + $0x80]]
    %v112 = vstv %s111
    %v113 = vmul.f32 %v112, %v96
    %v114 = vadd.f32 %v110, %v113
    %s115 = sld [smem:[#allocation10 + $0x100]]
    %v116 = vstv %s115
    %v117 = vmul.f32 %v116, %v107
    %v118 = vadd.f32 %v114, %v117
    %s119 = sld [smem:[#allocation2]]
    %v120 = vstv %s119
    %v121 = vadd.f32 %v118, %v120
    %v122 = vxor.u32 %v121, 2147483648
    %v123 = vmul.f32 %v122, 1.442695
    %v124 = vpow.pop %v123
    %v125 = vadd.f32 %v124, 1.0
    %v126 = vrcp.pop %v125
    %v127 = vmul.f32 1.0, %v126
    %128 = vst [vmem:[#allocation11] sm:$0xff] %v127
    // Predicated region
    $region38: #{tpu_custom_call.1} parent=1 // pred_check
      _
    $region39: #{tpu_custom_call.1} parent=1 // pred_check_branch
      %130 = sbr.rel (0) target = $region41
    $region40: #{tpu_custom_call.1} parent=1 // pred_region
      %s132 = ssub.s32 128, 128
      %133 = vsyncadd [#allocation5], %s132
      %s135 = sshll.u32 [#allocation11], 4
      %s136 = int_to_ptr.vmem [resolvable:$true] %s135
      %138 = dma.vmem_to_hbm [thread:$0]  %s136, 128, %s5, [#allocation5]
    $region41: #{tpu_custom_call.1} parent=1 // pred_fallthru
      _
    // Predicated region
    $region42: #{tpu_custom_call.1} parent=1 // pred_check
      _
    $region43: #{tpu_custom_call.1} parent=1 // pred_check_branch
      %140 = sbr.rel (0) target = $region45
    $region44: #{tpu_custom_call.1} parent=1 // pred_region
      %141 = dma.done [#allocation5], 128
    $region45: #{tpu_custom_call.1} parent=1 // pred_fallthru
      _
    %142 = vsyncpa [#allocation4], 1
    %143 = vsyncpa [#allocation5], 1
    %144 = vsyncpa [#allocation6], 1
    %145 = vsyncpa [#allocation9], 1

</llo_original>
